<compile_context>
chip_gen: v7x
topology: tpu7x:2x2x1
jax: 0.10.0
libtpu: 0.0.40
codegen_flags: <defaults>
</compile_context>

<pallas_src>
import functools

import jax
import jax.numpy as jnp
from jax import lax
from jax.experimental import pallas as pl
from jax.experimental.pallas import tpu as pltpu


def _round_up(n: int, m: int) -> int:
    return ((n + m - 1) // m) * m


def _hash32(x):
    """splitmix32-style avalanche hash on uint32 (portable: plain VPU int ops)."""
    x = x ^ (x >> 16)
    x = x * jnp.uint32(0x7FEB352D)
    x = x ^ (x >> 15)
    x = x * jnp.uint32(0x846CA68B)
    x = x ^ (x >> 16)
    return x


def _mlp2_kernel(seed_ref,                                   # SMEM scalar prefetch
                 x_ref, w1_ref, b1_ref, w2_ref, b2_ref,      # VMEM inputs
                 o_ref,                                      # VMEM output
                 *, dropout_p: float, training: bool):
    x = x_ref[...]

    # ---- Layer 0: Linear(in -> hid) + ReLU + Dropout -------------------------
    h = jnp.dot(x, w1_ref[...], preferred_element_type=jnp.float32) + b1_ref[...]
    h = jnp.maximum(h, 0.0)

    if training and dropout_p > 0.0:
        if dropout_p >= 1.0:
            h = jnp.zeros_like(h)
        else:
            tile_b, hid_cols = h.shape
            # Counter-based RNG keyed on (seed, global row, col): unique per tile,
            # no TPU-only PRNG primitives needed; pure VPU integer ops.
            row = lax.broadcasted_iota(jnp.int32, h.shape, 0).astype(jnp.uint32)
            col = lax.broadcasted_iota(jnp.int32, h.shape, 1).astype(jnp.uint32)
            base = (pl.program_id(0) * tile_b).astype(jnp.uint32)
            ctr = (row + base) * jnp.uint32(hid_cols) + col
            seed = seed_ref[0].astype(jnp.uint32)
            bits = _hash32(ctr ^ (seed * jnp.uint32(0x9E3779B9)))
            # keep iff uniform-in-[0,1) >= p   <=>   bits >= p * 2^32
            threshold = jnp.uint32(min(int(dropout_p * 4294967296.0), 4294967295))
            keep = bits >= threshold
            scale = jnp.float32(1.0 / (1.0 - dropout_p))
            h = jnp.where(keep, h * scale, jnp.float32(0.0))

    # ---- Layer 1 (last): Linear(hid -> out), no activation / dropout ---------
    y = jnp.dot(h.astype(w2_ref.dtype), w2_ref[...],
                preferred_element_type=jnp.float32) + b2_ref[...]
    o_ref[...] = y.astype(o_ref.dtype)


def prepare_params(w1, b1, w2, b2, *, compute_dtype=jnp.bfloat16):
    """One-time prep: transpose PyTorch-style [out,in] weights to [in,out], pad the
    feature dims to multiples of 128 (lane width) and cast to the compute dtype."""
    hid_size, in_size = w1.shape
    out_size = w2.shape[0]
    in_p = _round_up(in_size, 128)
    hid_p = _round_up(hid_size, 128)
    out_p = _round_up(out_size, 128)

    w1_t = jnp.zeros((in_p, hid_p), compute_dtype)
    w1_t = w1_t.at[:in_size, :hid_size].set(jnp.asarray(w1, compute_dtype).T)
    w2_t = jnp.zeros((hid_p, out_p), compute_dtype)
    w2_t = w2_t.at[:hid_size, :out_size].set(jnp.asarray(w2, compute_dtype).T)
    b1_r = jnp.zeros((1, hid_p), jnp.float32).at[0, :hid_size].set(
        jnp.asarray(b1, jnp.float32))
    b2_r = jnp.zeros((1, out_p), jnp.float32).at[0, :out_size].set(
        jnp.asarray(b2, jnp.float32))

    return dict(w1=w1_t, b1=b1_r, w2=w2_t, b2=b2_r,
                in_size=in_size, hid_size=hid_size, out_size=out_size,
                in_p=in_p, hid_p=hid_p, out_p=out_p,
                compute_dtype=jnp.dtype(compute_dtype))


def _pick_tile_b(B: int, in_p: int, hid_p: int, out_p: int, itemsize: int,
                 row_align: int) -> int:
    """Largest batch tile (<=1024, sublane-aligned) whose working set fits a
    conservative VMEM budget (double-buffered x/out + resident weights + f32 h)."""
    budget = 48 * 1024 * 1024
    resident = 2 * (in_p * hid_p + hid_p * out_p) * itemsize + 2 * (hid_p + out_p) * 4
    tile = min(1024, _round_up(B, row_align))
    tile = _round_up(tile, row_align)
    while tile > row_align:
        per_tile = (2 * tile * in_p * itemsize        # double-buffered x
                    + 2 * tile * out_p * 4            # double-buffered out (f32)
                    + 3 * tile * hid_p * 4)           # f32 hidden temporaries
        if resident + per_tile <= budget:
            break
        tile //= 2
        tile = max(row_align, _round_up(tile, row_align))
    return tile


def mlp_forward(x, params, *, dropout_p=0.5, training=True, seed=0, tile_b=None):
    """x: [B, in_size]. Returns [B, out_size] float32."""
    B, in_size = x.shape
    assert in_size == params["in_size"]
    cd = params["compute_dtype"]
    in_p, hid_p, out_p = params["in_p"], params["hid_p"], params["out_p"]
    out_size = params["out_size"]

    # Batch tile: multiple of the sublane packing for the compute dtype.
    row_align = 32 // cd.itemsize            # 8 for f32, 16 for bf16
    if tile_b is None:
        tile_b = _pick_tile_b(B, in_p, hid_p, out_p, cd.itemsize, row_align)
    tile_b = _round_up(tile_b, row_align)
    B_p = _round_up(B, tile_b)
    grid = (B_p // tile_b,)

    x_cd = jnp.asarray(x, cd)
    x_p = jnp.pad(x_cd, ((0, B_p - B), (0, in_p - in_size)))
    seed_arr = jnp.asarray([seed], jnp.int32)

    kernel = functools.partial(_mlp2_kernel, dropout_p=float(dropout_p),
                               training=bool(training))

    grid_spec = pltpu.PrefetchScalarGridSpec(
        num_scalar_prefetch=1,
        grid=grid,
        in_specs=[
            pl.BlockSpec((tile_b, in_p), lambda i, seed: (i, 0)),   # x walks batch
            pl.BlockSpec((in_p, hid_p),  lambda i, seed: (0, 0)),   # resident weights
            pl.BlockSpec((1, hid_p),     lambda i, seed: (0, 0)),
            pl.BlockSpec((hid_p, out_p), lambda i, seed: (0, 0)),
            pl.BlockSpec((1, out_p),     lambda i, seed: (0, 0)),
        ],
        out_specs=pl.BlockSpec((tile_b, out_p), lambda i, seed: (i, 0)),
    )

    # Advisory cost estimate so XLA schedules surrounding ops sensibly.
    w1_t, w2_t, b1_r, b2_r = params["w1"], params["w2"], params["b1"], params["b2"]
    flops = 2 * B_p * in_p * hid_p + 2 * B_p * hid_p * out_p
    bytes_accessed = (x_p.size * x_p.dtype.itemsize
                      + w1_t.size * w1_t.dtype.itemsize
                      + w2_t.size * w2_t.dtype.itemsize
                      + b1_r.size * 4 + b2_r.size * 4
                      + B_p * out_p * 4)
    cost = pl.CostEstimate(flops=flops, transcendentals=0,
                           bytes_accessed=bytes_accessed)

    # VMEM budget: double-buffered x/out tiles + resident weights + f32 h temporaries.
    dt = cd.itemsize
    vmem_est = (2 * tile_b * in_p * dt
                + 2 * tile_b * out_p * 4
                + 2 * (in_p * hid_p + hid_p * out_p) * dt
                + 2 * (hid_p + out_p) * 4
                + 3 * tile_b * hid_p * 4)
    vmem_limit = int(min(max(vmem_est * 3 // 2, 32 * 1024 * 1024), 56 * 1024 * 1024))

    y_p = pl.pallas_call(
        kernel,
        out_shape=jax.ShapeDtypeStruct((B_p, out_p), jnp.float32),
        grid_spec=grid_spec,
        compiler_params=pltpu.CompilerParams(
            dimension_semantics=("parallel",),      # batch tiles are independent
            vmem_limit_bytes=vmem_limit),
        cost_estimate=cost,
    )(seed_arr, x_p, w1_t, b1_r, w2_t, b2_r)

    return y_p[:B, :out_size]


def _init_linear(key, out_features, in_features):
    # Deterministic init mimicking nn.Linear's U(-1/sqrt(fan_in), 1/sqrt(fan_in)).
    kw, kb = jax.random.split(key)
    bound = 1.0 / jnp.sqrt(jnp.float32(in_features))
    w = jax.random.uniform(kw, (out_features, in_features), jnp.float32, -bound, bound)
    b = jax.random.uniform(kb, (out_features,), jnp.float32, -bound, bound)
    return w, b


if __name__ == "__main__":
    # Small shapes consistent with the module (nlayers=2 MLP).
    batch, in_size, hid_size, out_size = 8, 16, 32, 8
    dropout_p = 0.5

    key = jax.random.PRNGKey(0)
    kx, k1, k2 = jax.random.split(key, 3)

    x = jax.random.normal(kx, (batch, in_size), jnp.float32)
    w1, b1 = _init_linear(k1, hid_size, in_size)
    w2, b2 = _init_linear(k2, out_size, hid_size)

    # --- Strict correctness check: f32 compute path, eval mode (dropout = identity).
    params_f32 = prepare_params(w1, b1, w2, b2, compute_dtype=jnp.float32)
    y_eval = mlp_forward(x, params_f32, dropout_p=dropout_p, training=False)
    jax.block_until_ready(y_eval)

    h_ref = jnp.maximum(x @ w1.T + b1, 0.0)
    y_ref = h_ref @ w2.T + b2
    assert y_eval.shape == (batch, out_size)
    assert jnp.allclose(y_eval, y_ref, atol=1e-5, rtol=1e-5)

    # --- Fast path: bf16 compute, train mode (dropout active, per-tile hashed mask).
    params_bf16 = prepare_params(w1, b1, w2, b2, compute_dtype=jnp.bfloat16)
    y_train = mlp_forward(x, params_bf16, dropout_p=dropout_p, training=True, seed=1234)
    jax.block_until_ready(y_train)
    assert y_train.shape == (batch, out_size)
    assert bool(jnp.all(jnp.isfinite(y_train)))

    # bf16 eval path should still track the f32 reference loosely.
    y_eval_bf16 = mlp_forward(x, params_bf16, dropout_p=dropout_p, training=False)
    jax.block_until_ready(y_eval_bf16)
    assert jnp.allclose(y_eval_bf16, y_ref, atol=5e-2, rtol=5e-2)

    print("KERNEL_OK")
</pallas_src>

<mosaic_0001>
module attributes {stable_mosaic.version = 11 : i64} {
  func.func @_mlp2_kernel(%arg0: i32, %arg1: memref<1xi32, #tpu.memory_space<smem>>, %arg2: memref<8x128xf32, #tpu.memory_space<vmem>>, %arg3: memref<128x128xf32, #tpu.memory_space<vmem>>, %arg4: memref<1x128xf32, #tpu.memory_space<vmem>>, %arg5: memref<128x128xf32, #tpu.memory_space<vmem>>, %arg6: memref<1x128xf32, #tpu.memory_space<vmem>>, %arg7: memref<8x128xf32, #tpu.memory_space<vmem>>) attributes {dimension_semantics = [#tpu.dimension_semantics<parallel>], iteration_bounds = array<i64: 1>, scalar_prefetch = 1 : i64, scratch_operands = 0 : i64, tpu.core_type = #tpu.core_type<tc>, window_params = [{transform_indices = @transform_0, window_bounds = array<i64: 8, 128>}, {pipeline_mode = #tpu.pipeline_mode<synchronous>, transform_indices = @transform_1, window_bounds = array<i64: 128, 128>}, {pipeline_mode = #tpu.pipeline_mode<synchronous>, transform_indices = @transform_2, window_bounds = array<i64: 1, 128>}, {pipeline_mode = #tpu.pipeline_mode<synchronous>, transform_indices = @transform_3, window_bounds = array<i64: 128, 128>}, {pipeline_mode = #tpu.pipeline_mode<synchronous>, transform_indices = @transform_4, window_bounds = array<i64: 1, 128>}, {transform_indices = @transform_5, window_bounds = array<i64: 8, 128>}]} {
    %c0 = arith.constant 0 : index
    %c0_0 = arith.constant 0 : index
    %0 = vector.load %arg2[%c0, %c0_0] : memref<8x128xf32, #tpu.memory_space<vmem>>, vector<8x128xf32>
    %c0_1 = arith.constant 0 : index
    %c0_2 = arith.constant 0 : index
    %1 = vector.load %arg3[%c0_1, %c0_2] : memref<128x128xf32, #tpu.memory_space<vmem>>, vector<128x128xf32>
    %cst = arith.constant dense<0.000000e+00> : vector<8x128xf32>
    %2 = tpu.matmul %0, %1, %cst {dimension_numbers = #tpu.dot_dimension_numbers<[1], [0], [0], [1], [0, 0, 1, 1], [], []>} : vector<8x128xf32>, vector<128x128xf32>, vector<8x128xf32> -> vector<8x128xf32>
    %c0_3 = arith.constant 0 : index
    %c0_4 = arith.constant 0 : index
    %3 = vector.load %arg4[%c0_3, %c0_4] : memref<1x128xf32, #tpu.memory_space<vmem>>, vector<1x128xf32>
    %4 = vector.broadcast %3 : vector<1x128xf32> to vector<8x128xf32>
    %5 = arith.addf %2, %4 : vector<8x128xf32>
    %cst_5 = arith.constant 0.000000e+00 : f32
    %6 = vector.broadcast %cst_5 : f32 to vector<8x128xf32>
    %7 = arith.maximumf %5, %6 : vector<8x128xf32>
    %c0_6 = arith.constant 0 : index
    %c0_7 = arith.constant 0 : index
    %8 = vector.load %arg5[%c0_6, %c0_7] : memref<128x128xf32, #tpu.memory_space<vmem>>, vector<128x128xf32>
    %cst_8 = arith.constant dense<0.000000e+00> : vector<8x128xf32>
    %9 = tpu.matmul %7, %8, %cst_8 {dimension_numbers = #tpu.dot_dimension_numbers<[1], [0], [0], [1], [0, 0, 1, 1], [], []>} : vector<8x128xf32>, vector<128x128xf32>, vector<8x128xf32> -> vector<8x128xf32>
    %c0_9 = arith.constant 0 : index
    %c0_10 = arith.constant 0 : index
    %10 = vector.load %arg6[%c0_9, %c0_10] : memref<1x128xf32, #tpu.memory_space<vmem>>, vector<1x128xf32>
    %11 = vector.broadcast %10 : vector<1x128xf32> to vector<8x128xf32>
    %12 = arith.addf %9, %11 : vector<8x128xf32>
    %c0_11 = arith.constant 0 : index
    %c0_12 = arith.constant 0 : index
    %13 = vector.load %arg7[%c0_11, %c0_12] : memref<8x128xf32, #tpu.memory_space<vmem>>, vector<8x128xf32>
    tpu.vector_store %arg7[%c0_11, %c0_12], %12 {strides = array<i32>} : memref<8x128xf32, #tpu.memory_space<vmem>>, vector<8x128xf32>,
    return
  }
  func.func @transform_0(%arg0: i32, %arg1: memref<1xi32, #tpu.memory_space<smem>>) -> (i32, i32) {
    %c0_i32 = arith.constant 0 : i32
    %c0_i32_0 = arith.constant 0 : i32
    return %arg0, %c0_i32 : i32, i32
  }
  func.func @transform_1(%arg0: i32, %arg1: memref<1xi32, #tpu.memory_space<smem>>) -> (i32, i32) {
    %c0_i32 = arith.constant 0 : i32
    %c0_i32_0 = arith.constant 0 : i32
    %c0_i32_1 = arith.constant 0 : i32
    return %c0_i32, %c0_i32_0 : i32, i32
  }
  func.func @transform_2(%arg0: i32, %arg1: memref<1xi32, #tpu.memory_space<smem>>) -> (i32, i32) {
    %c0_i32 = arith.constant 0 : i32
    %c0_i32_0 = arith.constant 0 : i32
    %c0_i32_1 = arith.constant 0 : i32
    return %c0_i32, %c0_i32_0 : i32, i32
  }
  func.func @transform_3(%arg0: i32, %arg1: memref<1xi32, #tpu.memory_space<smem>>) -> (i32, i32) {
    %c0_i32 = arith.constant 0 : i32
    %c0_i32_0 = arith.constant 0 : i32
    %c0_i32_1 = arith.constant 0 : i32
    return %c0_i32, %c0_i32_0 : i32, i32
  }
  func.func @transform_4(%arg0: i32, %arg1: memref<1xi32, #tpu.memory_space<smem>>) -> (i32, i32) {
    %c0_i32 = arith.constant 0 : i32
    %c0_i32_0 = arith.constant 0 : i32
    %c0_i32_1 = arith.constant 0 : i32
    return %c0_i32, %c0_i32_0 : i32, i32
  }
  func.func @transform_5(%arg0: i32, %arg1: memref<1xi32, #tpu.memory_space<smem>>) -> (i32, i32) {
    %c0_i32 = arith.constant 0 : i32
    %c0_i32_0 = arith.constant 0 : i32
    return %arg0, %c0_i32 : i32, i32
  }
}

</mosaic_0001>

<llo_original>
// kernel: tpu_custom_call.1
$region0: #{tpu_custom_call.1}
  #allocation0 [shape = 'u32[]', space=smem, size = 0x4, offset = 0x4, fixed_abs, tag = 'smem constant byte address 0x4 - core index']
  #allocation1 [shape = 'u32[144,128]{1,0:T(1,128)}', space=vmem, size = 0x12000, scoped, tag = 'internal scratch']
  #allocation2 [shape = 's32[1]{0}', space=sflag, size = 0x4, scoped, tag = 'scoped memory for tpu_custom_call.1']
  #allocation3 [shape = 's32[1]{0:T(128)S(6)}', space=smem, size = 0x200, scoped, tag = 'prefetched SMEM operand 0']
  %s0 = inlined_call_operand.<no memory space> [shape: s32[1], index: 0, kind: input, shape index: {}]
  %s1 = inlined_call_operand.hbm [shape: f32[8,128], index: 1, kind: input, shape index: {}]
  %s2 = inlined_call_operand.hbm [shape: f32[128,128], index: 2, kind: input, shape index: {}]
  %s3 = inlined_call_operand.vmem [shape: f32[1,128], index: 3, kind: input, shape index: {}]
  %s4 = inlined_call_operand.hbm [shape: f32[128,128], index: 4, kind: input, shape index: {}]
  %s5 = inlined_call_operand.vmem [shape: f32[1,128], index: 5, kind: input, shape index: {}]
  %s6 = inlined_call_operand.hbm [shape: f32[8,128], index: 6, kind: output, shape index: {}]
  %s7 = sld [smem:[#allocation0]]
  $region42: #{tpu_custom_call.1} parent=0
    _
  %s9 = ssub.s32 1, %s7
  %s10 = scalar_select 0, %s9, %s7
  %11 = sst [smem:[#allocation3]] %s0
  $region1: #{tpu_custom_call.1} parent=0
    #allocation4 [shape = 'u8[4096]{0}', space=vmem, size = 0x1000, scoped, tag = 'input window, operand 1, single buffered']
    #allocation5 [shape = 's32[1]{0}', space=sflag, size = 0x4, scoped, tag = 'scoped memory for tpu_custom_call.1']
    #allocation6 [shape = 's32[1]{0}', space=sflag, size = 0x4, scoped, tag = 'scoped memory for tpu_custom_call.1']
    #allocation7 [shape = 'u8[65536]{0}', space=vmem, size = 0x10000, scoped, tag = 'input window, operand 2, single buffered']
    #allocation8 [shape = 's32[1]{0}', space=sflag, size = 0x4, scoped, tag = 'scoped memory for tpu_custom_call.1']
    #allocation9 [shape = 'u8[65536]{0}', space=vmem, size = 0x10000, scoped, tag = 'input window, operand 4, single buffered']
    #allocation10 [shape = 'u8[4096]{0}', space=vmem, size = 0x1000, scoped, tag = 'output window, operand 0, single buffered']
    %12 = vsyncpa [#allocation5], 0
    %13 = vsyncpa [#allocation8], 0
    %14 = vsyncpa [#allocation6], 0
    // Predicated region
    $region2: #{tpu_custom_call.1} parent=1 // pred_check
      _
    $region3: #{tpu_custom_call.1} parent=1 // pred_check_branch
      %16 = sbr.rel (0) target = $region5
    $region4: #{tpu_custom_call.1} parent=1 // pred_region
      %s18 = ssub.s32 128, 128
      %19 = vsyncadd [#allocation5], %s18
      %s21 = sshll.u32 [#allocation4], 4
      %s22 = int_to_ptr.vmem [resolvable:$true] %s21
      %24 = dma.hbm_to_vmem [thread:$0]  %s1, 128, %s22, [#allocation5]
    $region5: #{tpu_custom_call.1} parent=1 // pred_fallthru
      _
    // Predicated region
    $region6: #{tpu_custom_call.1} parent=1 // pred_check
      _
    $region7: #{tpu_custom_call.1} parent=1 // pred_check_branch
      %26 = sbr.rel (0) target = $region9
    $region8: #{tpu_custom_call.1} parent=1 // pred_region
      %s28 = ssub.s32 2048, 2048
      %29 = vsyncadd [#allocation8], %s28
      %s30 = sshll.u32 [#allocation7], 4
      %s31 = int_to_ptr.vmem [resolvable:$true] %s30
      %36 = dma.hbm_to_vmem [thread:$0]  %s2, 2048, %s31, [#allocation8], 128, 128, 8
    $region9: #{tpu_custom_call.1} parent=1 // pred_fallthru
      _
    // Predicated region
    $region10: #{tpu_custom_call.1} parent=1 // pred_check
      _
    $region11: #{tpu_custom_call.1} parent=1 // pred_check_branch
      %38 = sbr.rel (0) target = $region13
    $region12: #{tpu_custom_call.1} parent=1 // pred_region
      _
    $region13: #{tpu_custom_call.1} parent=1 // pred_fallthru
      _
    // Predicated region
    $region14: #{tpu_custom_call.1} parent=1 // pred_check
      _
    $region15: #{tpu_custom_call.1} parent=1 // pred_check_branch
      %40 = sbr.rel (0) target = $region17
    $region16: #{tpu_custom_call.1} parent=1 // pred_region
      %s42 = ssub.s32 2048, 2048
      %43 = vsyncadd [#allocation8], %s42
      %s44 = sshll.u32 [#allocation9], 4
      %s45 = int_to_ptr.vmem [resolvable:$true] %s44
      %50 = dma.hbm_to_vmem [thread:$0]  %s4, 2048, %s45, [#allocation8], 128, 128, 8
    $region17: #{tpu_custom_call.1} parent=1 // pred_fallthru
      _
    // Predicated region
    $region18: #{tpu_custom_call.1} parent=1 // pred_check
      _
    $region19: #{tpu_custom_call.1} parent=1 // pred_check_branch
      %52 = sbr.rel (0) target = $region21
    $region20: #{tpu_custom_call.1} parent=1 // pred_region
      _
    $region21: #{tpu_custom_call.1} parent=1 // pred_fallthru
      _
    // Predicated region
    $region22: #{tpu_custom_call.1} parent=1 // pred_check
      _
    $region23: #{tpu_custom_call.1} parent=1 // pred_check_branch
      %54 = sbr.rel (0) target = $region25
    $region24: #{tpu_custom_call.1} parent=1 // pred_region
      %55 = dma.done [#allocation5], 128
    $region25: #{tpu_custom_call.1} parent=1 // pred_fallthru
      _
    // Predicated region
    $region26: #{tpu_custom_call.1} parent=1 // pred_check
      _
    $region27: #{tpu_custom_call.1} parent=1 // pred_check_branch
      %57 = sbr.rel (0) target = $region29
    $region28: #{tpu_custom_call.1} parent=1 // pred_region
      %58 = dma.done [#allocation8], 2048
    $region29: #{tpu_custom_call.1} parent=1 // pred_fallthru
      _
    // Predicated region
    $region30: #{tpu_custom_call.1} parent=1 // pred_check
      _
    $region31: #{tpu_custom_call.1} parent=1 // pred_check_branch
      %60 = sbr.rel (0) target = $region33
    $region32: #{tpu_custom_call.1} parent=1 // pred_region
      %61 = dma.done [#allocation8], 2048
    $region33: #{tpu_custom_call.1} parent=1 // pred_fallthru
      _
    %v62 = vld [vmem:[#allocation4] sm:$0xff]
    %v63 = vld [vmem:[#allocation7] sm:$0xff]
    %v64 = vld [vmem:[#allocation7 + $0x8] sm:$0xff]
    %v65 = vld [vmem:[#allocation7 + $0x10] sm:$0xff]
    %v66 = vld [vmem:[#allocation7 + $0x18] sm:$0xff]
    %v67 = vld [vmem:[#allocation7 + $0x20] sm:$0xff]
    %v68 = vld [vmem:[#allocation7 + $0x28] sm:$0xff]
    %v69 = vld [vmem:[#allocation7 + $0x30] sm:$0xff]
    %v70 = vld [vmem:[#allocation7 + $0x38] sm:$0xff]
    %v71 = vld [vmem:[#allocation7 + $0x40] sm:$0xff]
    %v72 = vld [vmem:[#allocation7 + $0x48] sm:$0xff]
    %v73 = vld [vmem:[#allocation7 + $0x50] sm:$0xff]
    %v74 = vld [vmem:[#allocation7 + $0x58] sm:$0xff]
    %v75 = vld [vmem:[#allocation7 + $0x60] sm:$0xff]
    %v76 = vld [vmem:[#allocation7 + $0x68] sm:$0xff]
    %v77 = vld [vmem:[#allocation7 + $0x70] sm:$0xff]
    %v78 = vld [vmem:[#allocation7 + $0x78] sm:$0xff]
    %v79 = vld [vmem:[%s3] sm:$0x1]
    %v81 = vlaneseq
    %v82 = vshrl.u32 %v81, 7
    %v83 = vsub.s32 0, %v82
    %v84 = vrot.slane %v79, %v83
    %86 = vmatprep.subr.mxu0 0.0
    %87 = vmatpush1.msra.mxu0 %v63
    %88 = vmatprep.subr.mxu0 0.0
    %89 = vmatpush1.msra.mxu0 %v64
    %90 = vmatprep.subr.mxu0 0.0
    %91 = vmatpush1.msra.mxu0 %v65
    %92 = vmatprep.subr.mxu0 0.0
    %93 = vmatpush1.msra.mxu0 %v66
    %94 = vmatprep.subr.mxu0 0.0
    %95 = vmatpush1.msra.mxu0 %v67
    %96 = vmatprep.subr.mxu0 0.0
    %97 = vmatpush1.msra.mxu0 %v68
    %98 = vmatprep.subr.mxu0 0.0
    %99 = vmatpush1.msra.mxu0 %v69
    %100 = vmatprep.subr.mxu0 0.0
    %101 = vmatpush1.msra.mxu0 %v70
    %102 = vmatprep.subr.mxu0 0.0
    %103 = vmatpush1.msra.mxu0 %v71
    %104 = vmatprep.subr.mxu0 0.0
    %105 = vmatpush1.msra.mxu0 %v72
    %106 = vmatprep.subr.mxu0 0.0
    %107 = vmatpush1.msra.mxu0 %v73
    %108 = vmatprep.subr.mxu0 0.0
    %109 = vmatpush1.msra.mxu0 %v74
    %110 = vmatprep.subr.mxu0 0.0
    %111 = vmatpush1.msra.mxu0 %v75
    %112 = vmatprep.subr.mxu0 0.0
    %113 = vmatpush1.msra.mxu0 %v76
    %114 = vmatprep.subr.mxu0 0.0
    %115 = vmatpush1.msra.mxu0 %v77
    %116 = vmatprep.subr.mxu0 0.0
    %117 = vmatpush1.msra.mxu0 %v78
    %118 = vmatprep.subr.mxu0 0.0
    %119 = vmatpush1.msra.mxu0 0.0
    %120 = vmatprep.subr.mxu0 0.0
    %121 = vmatpush1.msra.mxu0 0.0
    %122 = vmatprep.subr.mxu0 0.0
    %123 = vmatpush1.msra.mxu0 0.0
    %124 = vmatprep.subr.mxu0 0.0
    %125 = vmatpush1.msra.mxu0 0.0
    %126 = vmatprep.subr.mxu0 0.0
    %127 = vmatpush1.msra.mxu0 0.0
    %128 = vmatprep.subr.mxu0 0.0
    %129 = vmatpush1.msra.mxu0 0.0
    %130 = vmatprep.subr.mxu0 0.0
    %131 = vmatpush1.msra.mxu0 0.0
    %132 = vmatprep.subr.mxu0 0.0
    %133 = vmatpush1.msra.mxu0 0.0
    %134 = vmatprep.subr.mxu0 0.0
    %135 = vmatpush1.msra.mxu0 0.0
    %136 = vmatprep.subr.mxu0 0.0
    %137 = vmatpush1.msra.mxu0 0.0
    %138 = vmatprep.subr.mxu0 0.0
    %139 = vmatpush1.msra.mxu0 0.0
    %140 = vmatprep.subr.mxu0 0.0
    %141 = vmatpush1.msra.mxu0 0.0
    %142 = vmatprep.subr.mxu0 0.0
    %143 = vmatpush1.msra.mxu0 0.0
    %144 = vmatprep.subr.mxu0 0.0
    %145 = vmatpush1.msra.mxu0 0.0
    %146 = vmatprep.subr.mxu0 0.0
    %147 = vmatpush1.msra.mxu0 0.0
    %148 = vmatprep.subr.mxu0 0.0
    %149 = vmatpush1.msra.mxu0 0.0
    %150 = vmatprep.mubr.f32.mxu0 0.0
    %151 = vmatmul.mubr.f32.gmra.mrb[0].mxu0 %v62
    %v152 = vpop.f32.mrb[0].mxu0
    %v153 = vadd.f32 %v84, %v152
    %v154 = vpop.f32.mrb[0].mxu0
    %155 = vdwg.mxu0
    %v156 = vmax.f32 %v153, 0.0
    %v157 = vld [vmem:[#allocation9] sm:$0xff]
    %v158 = vld [vmem:[#allocation9 + $0x8] sm:$0xff]
    %v159 = vld [vmem:[#allocation9 + $0x10] sm:$0xff]
    %v160 = vld [vmem:[#allocation9 + $0x18] sm:$0xff]
    %v161 = vld [vmem:[#allocation9 + $0x20] sm:$0xff]
    %v162 = vld [vmem:[#allocation9 + $0x28] sm:$0xff]
    %v163 = vld [vmem:[#allocation9 + $0x30] sm:$0xff]
    %v164 = vld [vmem:[#allocation9 + $0x38] sm:$0xff]
    %v165 = vld [vmem:[#allocation9 + $0x40] sm:$0xff]
    %v166 = vld [vmem:[#allocation9 + $0x48] sm:$0xff]
    %v167 = vld [vmem:[#allocation9 + $0x50] sm:$0xff]
    %v168 = vld [vmem:[#allocation9 + $0x58] sm:$0xff]
    %v169 = vld [vmem:[#allocation9 + $0x60] sm:$0xff]
    %v170 = vld [vmem:[#allocation9 + $0x68] sm:$0xff]
    %v171 = vld [vmem:[#allocation9 + $0x70] sm:$0xff]
    %v172 = vld [vmem:[#allocation9 + $0x78] sm:$0xff]
    %v173 = vld [vmem:[%s5] sm:$0x1]
    %v175 = vlaneseq
    %v176 = vshrl.u32 %v175, 7
    %v177 = vsub.s32 0, %v176
    %v178 = vrot.slane %v173, %v177
    %180 = vmatprep.subr.mxu0 0.0
    %181 = vmatpush1.msra.mxu0 %v157
    %182 = vmatprep.subr.mxu0 0.0
    %183 = vmatpush1.msra.mxu0 %v158
    %184 = vmatprep.subr.mxu0 0.0
    %185 = vmatpush1.msra.mxu0 %v159
    %186 = vmatprep.subr.mxu0 0.0
    %187 = vmatpush1.msra.mxu0 %v160
    %188 = vmatprep.subr.mxu0 0.0
    %189 = vmatpush1.msra.mxu0 %v161
    %190 = vmatprep.subr.mxu0 0.0
    %191 = vmatpush1.msra.mxu0 %v162
    %192 = vmatprep.subr.mxu0 0.0
    %193 = vmatpush1.msra.mxu0 %v163
    %194 = vmatprep.subr.mxu0 0.0
    %195 = vmatpush1.msra.mxu0 %v164
    %196 = vmatprep.subr.mxu0 0.0
    %197 = vmatpush1.msra.mxu0 %v165
    %198 = vmatprep.subr.mxu0 0.0
    %199 = vmatpush1.msra.mxu0 %v166
    %200 = vmatprep.subr.mxu0 0.0
    %201 = vmatpush1.msra.mxu0 %v167
    %202 = vmatprep.subr.mxu0 0.0
    %203 = vmatpush1.msra.mxu0 %v168
    %204 = vmatprep.subr.mxu0 0.0
    %205 = vmatpush1.msra.mxu0 %v169
    %206 = vmatprep.subr.mxu0 0.0
    %207 = vmatpush1.msra.mxu0 %v170
    %208 = vmatprep.subr.mxu0 0.0
    %209 = vmatpush1.msra.mxu0 %v171
    %210 = vmatprep.subr.mxu0 0.0
    %211 = vmatpush1.msra.mxu0 %v172
    %212 = vmatprep.subr.mxu0 0.0
    %213 = vmatpush1.msra.mxu0 0.0
    %214 = vmatprep.subr.mxu0 0.0
    %215 = vmatpush1.msra.mxu0 0.0
    %216 = vmatprep.subr.mxu0 0.0
    %217 = vmatpush1.msra.mxu0 0.0
    %218 = vmatprep.subr.mxu0 0.0
    %219 = vmatpush1.msra.mxu0 0.0
    %220 = vmatprep.subr.mxu0 0.0
    %221 = vmatpush1.msra.mxu0 0.0
    %222 = vmatprep.subr.mxu0 0.0
    %223 = vmatpush1.msra.mxu0 0.0
    %224 = vmatprep.subr.mxu0 0.0
    %225 = vmatpush1.msra.mxu0 0.0
    %226 = vmatprep.subr.mxu0 0.0
    %227 = vmatpush1.msra.mxu0 0.0
    %228 = vmatprep.subr.mxu0 0.0
    %229 = vmatpush1.msra.mxu0 0.0
    %230 = vmatprep.subr.mxu0 0.0
    %231 = vmatpush1.msra.mxu0 0.0
    %232 = vmatprep.subr.mxu0 0.0
    %233 = vmatpush1.msra.mxu0 0.0
    %234 = vmatprep.subr.mxu0 0.0
    %235 = vmatpush1.msra.mxu0 0.0
    %236 = vmatprep.subr.mxu0 0.0
    %237 = vmatpush1.msra.mxu0 0.0
    %238 = vmatprep.subr.mxu0 0.0
    %239 = vmatpush1.msra.mxu0 0.0
    %240 = vmatprep.subr.mxu0 0.0
    %241 = vmatpush1.msra.mxu0 0.0
    %242 = vmatprep.subr.mxu0 0.0
    %243 = vmatpush1.msra.mxu0 0.0
    %244 = vmatprep.mubr.f32.mxu0 0.0
    %245 = vmatmul.mubr.f32.gmra.mrb[0].mxu0 %v156
    %v246 = vpop.f32.mrb[0].mxu0
    %v247 = vadd.f32 %v178, %v246
    %v248 = vpop.f32.mrb[0].mxu0
    %249 = vdwg.mxu0
    %250 = vst [vmem:[#allocation10] sm:$0xff] %v247
    // Predicated region
    $region34: #{tpu_custom_call.1} parent=1 // pred_check
      _
    $region35: #{tpu_custom_call.1} parent=1 // pred_check_branch
      %252 = sbr.rel (0) target = $region37
    $region36: #{tpu_custom_call.1} parent=1 // pred_region
      %s254 = ssub.s32 128, 128
      %255 = vsyncadd [#allocation6], %s254
      %s257 = sshll.u32 [#allocation10], 4
      %s258 = int_to_ptr.vmem [resolvable:$true] %s257
      %260 = dma.vmem_to_hbm [thread:$0]  %s258, 128, %s6, [#allocation6]
    $region37: #{tpu_custom_call.1} parent=1 // pred_fallthru
      _
    // Predicated region
    $region38: #{tpu_custom_call.1} parent=1 // pred_check
      _
    $region39: #{tpu_custom_call.1} parent=1 // pred_check_branch
      %262 = sbr.rel (0) target = $region41
    $region40: #{tpu_custom_call.1} parent=1 // pred_region
      %263 = dma.done [#allocation6], 128
    $region41: #{tpu_custom_call.1} parent=1 // pred_fallthru
      _
    %264 = vsyncpa [#allocation5], 1
    %265 = vsyncpa [#allocation8], 1
    %266 = vsyncpa [#allocation6], 1

</llo_original>
